<compile_context>
chip_gen: v6e
topology: v6e:2x2x1
jax: 0.10.0
libtpu: 0.0.40
codegen_flags: <defaults>
</compile_context>

<pallas_src>
import jax
import jax.numpy as jnp
from jax.experimental import pallas as pl
from jax.experimental.pallas import tpu as pltpu


def _round_up(x, m):
    return ((x + m - 1) // m) * m


def _cdiv(a, b):
    return (a + b - 1) // b


# ----------------------------------------------------------------------------
# Kernel
# ----------------------------------------------------------------------------
def _distmult_kernel(e1_ref, rel_ref, wt_ref, bt_ref, w_ref, b_ref, out_ref):
    # pred = e1_embedded * rel_embedded            (VPU, f32)
    pred = e1_ref[...] * rel_ref[...]

    # h = relu(pred @ Wt + bt)                     (MXU bf16, f32 accumulate)
    # Recomputed per column tile (trivial B_pad x D x D work, hidden under the
    # weight DMA) so each grid step is fully independent -> safe under
    # dimension_semantics=("parallel",) on v7x's two TensorCores.
    h = jnp.dot(pred.astype(jnp.bfloat16), wt_ref[...],
                preferred_element_type=jnp.float32)
    h = jnp.maximum(h + bt_ref[...], 0.0)

    # Fused output projection for this column tile: [E1 | R] = h @ [We|Wr] + [be|br]
    out_ref[...] = (
        jnp.dot(h.astype(jnp.bfloat16), w_ref[...],
                preferred_element_type=jnp.float32) + b_ref[...]
    ).astype(out_ref.dtype)


# ----------------------------------------------------------------------------
# One-time parameter preparation (hoisted out of the forward pass)
# ----------------------------------------------------------------------------
def _choose_tiling(ntot, d_pad, *, tn_target=4096, min_tiles=4,
                   batch_hint=128, vmem_budget_bytes=24 << 20):
    """Pick (tn, n_tiles, N_pad) for the fused output-column axis."""
    n_blocks = _cdiv(ntot, 256)                      # available 256-wide blocks
    n_tiles = max(1, _cdiv(ntot, max(256, tn_target)))
    n_tiles = max(n_tiles, min(min_tiles, n_blocks))  # feed both v7x TCs if possible
    if n_tiles > 1 and n_tiles % 2 == 1:
        n_tiles += 1                                  # even tile count for 2 TCs

    b_pad_hint = max(8, _round_up(batch_hint, 8))

    def vmem_estimate(tn):
        # Streamed (double-buffered by BlockSpec): bf16 weight tile + f32 bias + f32 out tile.
        streamed = 2 * (d_pad * tn * 2 + tn * 4 + b_pad_hint * tn * 4)
        # Residents (also double-buffered): e1, rel (f32), Wt (bf16), bt (f32).
        resident = 2 * (2 * b_pad_hint * d_pad * 4 + d_pad * d_pad * 2 + d_pad * 4)
        return streamed + resident

    while True:
        tn = _round_up(_cdiv(ntot, n_tiles), 256)     # lane-dense, multiple of 256
        if vmem_estimate(tn) <= vmem_budget_bytes or tn == 256:
            break
        n_tiles *= 2                                  # shrink tile until it fits VMEM

    return tn, n_tiles, n_tiles * tn


def prepare_decoder_params(params, *, tn_target=4096, batch_hint=128):
    """Fuse/pad/cast the decoder weights ONCE so every forward pass streams a
    pre-formatted (D_pad, N_pad) bf16 weight slab with no per-call HBM copies."""
    D = params["wt_t"].shape[0]
    NE = params["we_t"].shape[1]
    NR = params["wr_t"].shape[1]
    NTOT = NE + NR
    D_pad = _round_up(D, 128)

    tn, n_tiles, N_pad = _choose_tiling(NTOT, D_pad, tn_target=tn_target,
                                        batch_hint=batch_hint)

    f32, bf16 = jnp.float32, jnp.bfloat16

    wt_p = jnp.zeros((D_pad, D_pad), bf16).at[:D, :D].set(params["wt_t"].astype(bf16))
    bt_p = jnp.zeros((1, D_pad), f32).at[:, :D].set(params["bt"].astype(f32))

    w_out = jnp.concatenate([params["we_t"], params["wr_t"]], axis=1)
    b_out = jnp.concatenate([params["be"], params["br"]], axis=1)
    w_p = jnp.zeros((D_pad, N_pad), bf16).at[:D, :NTOT].set(w_out.astype(bf16))
    b_p = jnp.zeros((1, N_pad), f32).at[:, :NTOT].set(b_out.astype(f32))

    return dict(
        emb_e=params["emb_e"], emb_rel=params["emb_rel"],
        wt_p=wt_p, bt_p=bt_p, w_p=w_p, b_p=b_p,
        D=D, D_pad=D_pad, NE=NE, NR=NR, NTOT=NTOT,
        tn=tn, n_tiles=n_tiles, N_pad=N_pad,
    )


# ----------------------------------------------------------------------------
# Forward pass
# ----------------------------------------------------------------------------
def distmult_decoder(e1_emb, rel_emb, prep):
    """DistMult decode: mul -> linear_t -> relu -> fused {linear_e1, linear_rel}."""
    B, D = e1_emb.shape
    assert D == prep["D"]
    D_pad, tn, n_tiles, N_pad = prep["D_pad"], prep["tn"], prep["n_tiles"], prep["N_pad"]
    NE, NR, NTOT = prep["NE"], prep["NR"], prep["NTOT"]

    f32 = jnp.float32
    B_pad = max(8, _round_up(B, 8))                  # f32 sublane padding only

    # Only the tiny (B, D) activations are padded per call; weights are pre-formatted.
    e1_p = jnp.zeros((B_pad, D_pad), f32).at[:B, :D].set(e1_emb.astype(f32))
    rel_p = jnp.zeros((B_pad, D_pad), f32).at[:B, :D].set(rel_emb.astype(f32))

    resident = lambda shape: pl.BlockSpec(shape, lambda j: (0, 0))

    out = pl.pallas_call(
        _distmult_kernel,
        out_shape=jax.ShapeDtypeStruct((B_pad, N_pad), f32),
        grid_spec=pltpu.PrefetchScalarGridSpec(
            num_scalar_prefetch=0,
            grid=(n_tiles,),
            in_specs=[
                resident((B_pad, D_pad)),                      # e1_embedded (resident)
                resident((B_pad, D_pad)),                      # rel_embedded (resident)
                resident((D_pad, D_pad)),                      # linear_t.weight^T (bf16, resident)
                resident((1, D_pad)),                          # linear_t.bias (resident)
                pl.BlockSpec((D_pad, tn), lambda j: (0, j)),   # fused [We|Wr]^T tile (bf16, streamed)
                pl.BlockSpec((1, tn), lambda j: (0, j)),       # fused [be|br] tile
            ],
            out_specs=pl.BlockSpec((B_pad, tn), lambda j: (0, j)),
        ),
        compiler_params=pltpu.CompilerParams(
            dimension_semantics=("parallel",),   # column tiles are independent
        ),
    )(e1_p, rel_p, prep["wt_p"], prep["bt_p"], prep["w_p"], prep["b_p"])

    E1 = out[:B, :NE]
    R = out[:B, NE:NTOT]
    return E1, R


def distmult_forward(e1_idx, rel_idx, prep):
    """Full forward: embedding gather (plain JAX glue) + Pallas decode."""
    D = prep["D"]
    e1_emb = jnp.take(prep["emb_e"], e1_idx, axis=0).reshape(-1, D)
    rel_emb = jnp.take(prep["emb_rel"], rel_idx, axis=0).reshape(-1, D)
    return distmult_decoder(e1_emb, rel_emb, prep)


# ----------------------------------------------------------------------------
# Parameter construction (matches the PyTorch module's init)
# ----------------------------------------------------------------------------
def make_params(key, num_entities, num_relations, embedding_dim):
    ks = jax.random.split(key, 8)
    D, NE, NR = embedding_dim, num_entities, num_relations

    # Embeddings (xavier_normal_ in the reference init()); padding_idx=0 -> zero row 0.
    emb_e = jax.random.normal(ks[0], (NE, D), jnp.float32) * (2.0 / (NE + D)) ** 0.5
    emb_e = emb_e.at[0].set(0.0)
    emb_rel = jax.random.normal(ks[1], (NR, D), jnp.float32) * (2.0 / (NR + D)) ** 0.5
    emb_rel = emb_rel.at[0].set(0.0)

    # nn.Linear default init ~ U(-1/sqrt(in), 1/sqrt(in)); store weights transposed (in, out).
    lim = 1.0 / (D ** 0.5)
    wt_t = jax.random.uniform(ks[2], (D, D), jnp.float32, -lim, lim)
    bt = jax.random.uniform(ks[3], (1, D), jnp.float32, -lim, lim)
    we_t = jax.random.uniform(ks[4], (D, NE), jnp.float32, -lim, lim)
    be = jax.random.uniform(ks[5], (1, NE), jnp.float32, -lim, lim)
    wr_t = jax.random.uniform(ks[6], (D, NR), jnp.float32, -lim, lim)
    br = jax.random.uniform(ks[7], (1, NR), jnp.float32, -lim, lim)

    return dict(emb_e=emb_e, emb_rel=emb_rel,
                wt_t=wt_t, bt=bt, we_t=we_t, be=be, wr_t=wr_t, br=br)


if __name__ == "__main__":
    # Small Config-like sizes: embedding_dim=128, num_entities=256, num_relations=128, batch=8.
    NUM_ENTITIES = 256
    NUM_RELATIONS = 128
    EMBEDDING_DIM = 128
    BATCH = 8

    key = jax.random.PRNGKey(0)
    pkey, ik1, ik2 = jax.random.split(key, 3)
    params = make_params(pkey, NUM_ENTITIES, NUM_RELATIONS, EMBEDDING_DIM)

    # One-time weight fuse/pad/cast (hoisted out of the per-call path).
    prep = prepare_decoder_params(params, batch_hint=BATCH)
    prep = jax.tree_util.tree_map(
        lambda x: jax.block_until_ready(x) if isinstance(x, jax.Array) else x, prep)

    e1_idx = jax.random.randint(ik1, (BATCH,), 0, NUM_ENTITIES, dtype=jnp.int32)
    rel_idx = jax.random.randint(ik2, (BATCH,), 0, NUM_RELATIONS, dtype=jnp.int32)

    E1, R = distmult_forward(e1_idx, rel_idx, prep)
    jax.block_until_ready((E1, R))

    # Reference (plain JAX) decode, using the same bf16-weight / f32-accumulate path.
    e1_emb = jnp.take(params["emb_e"], e1_idx, axis=0)
    rel_emb = jnp.take(params["emb_rel"], rel_idx, axis=0)
    pred = e1_emb * rel_emb
    wt_b = params["wt_t"].astype(jnp.bfloat16)
    we_b = params["we_t"].astype(jnp.bfloat16)
    wr_b = params["wr_t"].astype(jnp.bfloat16)
    h_ref = jnp.maximum(
        jnp.dot(pred.astype(jnp.bfloat16), wt_b,
                preferred_element_type=jnp.float32) + params["bt"], 0.0)
    E1_ref = jnp.dot(h_ref.astype(jnp.bfloat16), we_b,
                     preferred_element_type=jnp.float32) + params["be"]
    R_ref = jnp.dot(h_ref.astype(jnp.bfloat16), wr_b,
                    preferred_element_type=jnp.float32) + params["br"]

    assert E1.shape == (BATCH, NUM_ENTITIES) and R.shape == (BATCH, NUM_RELATIONS)
    assert jnp.allclose(E1, E1_ref, atol=1e-2, rtol=1e-2)
    assert jnp.allclose(R, R_ref, atol=1e-2, rtol=1e-2)

    print("KERNEL_OK")
</pallas_src>

<mosaic_0001>
module attributes {stable_mosaic.version = 11 : i64} {
  func.func @_distmult_kernel(%arg0: i32, %arg1: memref<8x128xf32, #tpu.memory_space<vmem>>, %arg2: memref<8x128xf32, #tpu.memory_space<vmem>>, %arg3: memref<128x128xbf16, #tpu.memory_space<vmem>>, %arg4: memref<1x128xf32, #tpu.memory_space<vmem>>, %arg5: memref<128x256xbf16, #tpu.memory_space<vmem>>, %arg6: memref<1x256xf32, #tpu.memory_space<vmem>>, %arg7: memref<8x256xf32, #tpu.memory_space<vmem>>) attributes {dimension_semantics = [#tpu.dimension_semantics<parallel>], iteration_bounds = array<i64: 2>, scalar_prefetch = 0 : i64, scratch_operands = 0 : i64, tpu.core_type = #tpu.core_type<tc>, window_params = [{pipeline_mode = #tpu.pipeline_mode<synchronous>, transform_indices = @transform_0, window_bounds = array<i64: 8, 128>}, {pipeline_mode = #tpu.pipeline_mode<synchronous>, transform_indices = @transform_1, window_bounds = array<i64: 8, 128>}, {pipeline_mode = #tpu.pipeline_mode<synchronous>, transform_indices = @transform_2, window_bounds = array<i64: 128, 128>}, {pipeline_mode = #tpu.pipeline_mode<synchronous>, transform_indices = @transform_3, window_bounds = array<i64: 1, 128>}, {transform_indices = @transform_4, window_bounds = array<i64: 128, 256>}, {transform_indices = @transform_5, window_bounds = array<i64: 1, 256>}, {transform_indices = @transform_6, window_bounds = array<i64: 8, 256>}]} {
    %c0 = arith.constant 0 : index
    %c0_0 = arith.constant 0 : index
    %0 = vector.load %arg1[%c0, %c0_0] : memref<8x128xf32, #tpu.memory_space<vmem>>, vector<8x128xf32>
    %c0_1 = arith.constant 0 : index
    %c0_2 = arith.constant 0 : index
    %1 = vector.load %arg2[%c0_1, %c0_2] : memref<8x128xf32, #tpu.memory_space<vmem>>, vector<8x128xf32>
    %2 = arith.mulf %0, %1 : vector<8x128xf32>
    %3 = arith.truncf %2 : vector<8x128xf32> to vector<8x128xbf16>
    %c0_3 = arith.constant 0 : index
    %c0_4 = arith.constant 0 : index
    %4 = vector.load %arg3[%c0_3, %c0_4] : memref<128x128xbf16, #tpu.memory_space<vmem>>, vector<128x128xbf16>
    %cst = arith.constant dense<0.000000e+00> : vector<8x128xf32>
    %5 = tpu.matmul %3, %4, %cst {dimension_numbers = #tpu.dot_dimension_numbers<[1], [0], [0], [1], [0, 0, 1, 1], [], []>} : vector<8x128xbf16>, vector<128x128xbf16>, vector<8x128xf32> -> vector<8x128xf32>
    %c0_5 = arith.constant 0 : index
    %c0_6 = arith.constant 0 : index
    %6 = vector.load %arg4[%c0_5, %c0_6] : memref<1x128xf32, #tpu.memory_space<vmem>>, vector<1x128xf32>
    %7 = vector.broadcast %6 : vector<1x128xf32> to vector<8x128xf32>
    %8 = arith.addf %5, %7 : vector<8x128xf32>
    %cst_7 = arith.constant 0.000000e+00 : f32
    %9 = vector.broadcast %cst_7 : f32 to vector<8x128xf32>
    %10 = arith.maximumf %8, %9 : vector<8x128xf32>
    %11 = arith.truncf %10 : vector<8x128xf32> to vector<8x128xbf16>
    %c0_8 = arith.constant 0 : index
    %c0_9 = arith.constant 0 : index
    %12 = vector.load %arg5[%c0_8, %c0_9] : memref<128x256xbf16, #tpu.memory_space<vmem>>, vector<128x256xbf16>
    %cst_10 = arith.constant dense<0.000000e+00> : vector<8x256xf32>
    %13 = tpu.matmul %11, %12, %cst_10 {dimension_numbers = #tpu.dot_dimension_numbers<[1], [0], [0], [1], [0, 0, 1, 1], [], []>} : vector<8x128xbf16>, vector<128x256xbf16>, vector<8x256xf32> -> vector<8x256xf32>
    %c0_11 = arith.constant 0 : index
    %c0_12 = arith.constant 0 : index
    %14 = vector.load %arg6[%c0_11, %c0_12] : memref<1x256xf32, #tpu.memory_space<vmem>>, vector<1x256xf32>
    %15 = vector.broadcast %14 : vector<1x256xf32> to vector<8x256xf32>
    %16 = arith.addf %13, %15 : vector<8x256xf32>
    %c0_13 = arith.constant 0 : index
    %c0_14 = arith.constant 0 : index
    %17 = vector.load %arg7[%c0_13, %c0_14] : memref<8x256xf32, #tpu.memory_space<vmem>>, vector<8x256xf32>
    tpu.vector_store %arg7[%c0_13, %c0_14], %16 {strides = array<i32>} : memref<8x256xf32, #tpu.memory_space<vmem>>, vector<8x256xf32>,
    return
  }
  func.func @transform_0(%arg0: i32) -> (i32, i32) {
    %c0_i32 = arith.constant 0 : i32
    %c0_i32_0 = arith.constant 0 : i32
    %c0_i32_1 = arith.constant 0 : i32
    return %c0_i32, %c0_i32_0 : i32, i32
  }
  func.func @transform_1(%arg0: i32) -> (i32, i32) {
    %c0_i32 = arith.constant 0 : i32
    %c0_i32_0 = arith.constant 0 : i32
    %c0_i32_1 = arith.constant 0 : i32
    return %c0_i32, %c0_i32_0 : i32, i32
  }
  func.func @transform_2(%arg0: i32) -> (i32, i32) {
    %c0_i32 = arith.constant 0 : i32
    %c0_i32_0 = arith.constant 0 : i32
    %c0_i32_1 = arith.constant 0 : i32
    return %c0_i32, %c0_i32_0 : i32, i32
  }
  func.func @transform_3(%arg0: i32) -> (i32, i32) {
    %c0_i32 = arith.constant 0 : i32
    %c0_i32_0 = arith.constant 0 : i32
    %c0_i32_1 = arith.constant 0 : i32
    return %c0_i32, %c0_i32_0 : i32, i32
  }
  func.func @transform_4(%arg0: i32) -> (i32, i32) {
    %c0_i32 = arith.constant 0 : i32
    %c0_i32_0 = arith.constant 0 : i32
    return %c0_i32, %arg0 : i32, i32
  }
  func.func @transform_5(%arg0: i32) -> (i32, i32) {
    %c0_i32 = arith.constant 0 : i32
    %c0_i32_0 = arith.constant 0 : i32
    return %c0_i32, %arg0 : i32, i32
  }
  func.func @transform_6(%arg0: i32) -> (i32, i32) {
    %c0_i32 = arith.constant 0 : i32
    %c0_i32_0 = arith.constant 0 : i32
    return %c0_i32, %arg0 : i32, i32
  }
}

</mosaic_0001>

<llo_original>
// kernel: tpu_custom_call.1
$region0: #{tpu_custom_call.1}
  #allocation0 [shape = 'u32[]', space=smem, size = 0x4, offset = 0x4, fixed_abs, tag = 'smem constant byte address 0x4 - core index']
  #allocation1 [shape = 'u32[144,128]{1,0:T(1,128)}', space=vmem, size = 0x12000, scoped, tag = 'internal scratch']
  %s0 = inlined_call_operand.hbm [shape: f32[8,128], index: 0, kind: input, shape index: {}]
  %s1 = inlined_call_operand.hbm [shape: f32[8,128], index: 1, kind: input, shape index: {}]
  %s2 = inlined_call_operand.hbm [shape: bf16[128,128], index: 2, kind: input, shape index: {}]
  %s3 = inlined_call_operand.vmem [shape: f32[1,128], index: 3, kind: input, shape index: {}]
  %s4 = inlined_call_operand.hbm [shape: bf16[128,512], index: 4, kind: input, shape index: {}]
  %s5 = inlined_call_operand.vmem [shape: f32[1,512], index: 5, kind: input, shape index: {}]
  %s6 = inlined_call_operand.hbm [shape: f32[8,512], index: 6, kind: output, shape index: {}]
  %s7 = sld [smem:[#allocation0]]
  $region73: #{tpu_custom_call.1} parent=0
    _
  %s9 = ssub.s32 1, %s7
  %s10 = scalar_select 0, %s9, %s7
  $region1: #{tpu_custom_call.1} parent=0
    #allocation2 [shape = 'u8[4096]{0}', space=vmem, size = 0x1000, scoped, tag = 'input window, operand 0, single buffered']
    #allocation3 [shape = 's32[2]{0}', space=sflag, size = 0x8, scoped, tag = 'scoped memory for tpu_custom_call.1']
    #allocation4 [shape = 's32[2]{0}', space=sflag, size = 0x8, scoped, tag = 'scoped memory for tpu_custom_call.1']
    #allocation5 [shape = 'u8[4096]{0}', space=vmem, size = 0x1000, scoped, tag = 'input window, operand 1, single buffered']
    #allocation6 [shape = 's32[1]{0}', space=sflag, size = 0x4, scoped, tag = 'scoped memory for tpu_custom_call.1']
    #allocation7 [shape = 'u8[32768]{0}', space=vmem, size = 0x8000, scoped, tag = 'input window, operand 2, single buffered']
    #allocation8 [shape = 'u8[131072]{0}', space=vmem, size = 0x20000, scoped, tag = 'input window, operand 4']
    #allocation9 [shape = 's32[2]{0}', space=sflag, size = 0x8, scoped, tag = 'scoped memory for tpu_custom_call.1']
    #allocation10 [shape = 'u8[16384]{0}', space=vmem, size = 0x4000, scoped, tag = 'output window, operand 0']
    %11 = vsyncpa [#allocation3], 0
    %12 = vsyncpa [#allocation6], 0
    %13 = vsyncpa [#allocation9], 0
    %s14 = scalar_lea.sflag [#allocation9], 1
    %15 = vsyncpa %s14, 0
    %16 = vsyncpa [#allocation4], 0
    %s17 = scalar_lea.sflag [#allocation4], 1
    %18 = vsyncpa %s17, 0
    loop: start=0, step=1, limit=4
    $region2: #{tpu_custom_call.1} parent=1 // loop_pre_header
      _
    $region3: #{tpu_custom_call.1} parent=1 // loop_header
      %s20 = sphi 0, %s24
      %p21 = scmp.ge.s32.totalorder %s20, 4
      %s28 = sphi 0, %s28
      %s30 = sphi 0, %s28
      %s31 = sphi 0, %s30
      %s45 = sphi 0, %s31
      %s49 = sphi 0, %s49
      %s51 = sphi 0, %s49
      %s52 = sphi 0, %s51
      %s66 = sphi 0, %s52
      %s70 = sphi 0, %s70
      %s72 = sphi 0, %s70
      %s73 = sphi 0, %s72
      %s87 = sphi 0, %s73
      %s91 = sphi 0, %s91
      %s93 = sphi 0, %s91
      %s94 = sphi 0, %s93
      %s108 = sphi 0, %s94
      %s114 = sphi 0, %s116
      %s117 = sphi 0, %s114
      %s118 = sphi 0, %s117
      %s134 = sphi 0, %s118
      %s140 = sphi 0, %s142
      %s143 = sphi 0, %s140
      %s144 = sphi 0, %s143
      %s160 = sphi 0, %s144
      %s166 = sphi 0, %s168
      %s169 = sphi 0, %s166
      %s170 = sphi 0, %s169
      %s186 = sphi 0, %s170
    $region4: #{tpu_custom_call.1} parent=1 // loop_header_branch
      %23 = sbr.rel (%p21) target = $region8
    $region5: #{tpu_custom_call.1} parent=1 // loop_body
      %s25 = ssub.s32 %s20, 1
      %s26 = ssub.s32 %s20, 2
      %s27 = sadd.s32 %s20, 1
      %s29 = sadd.s32 %s28, 1
      %p32 = scmp.eq.s32.totalorder %s20, 1
      %p33 = scmp.ne.s32.totalorder %s28, %s30
      %p34 = scmp.eq.s32.totalorder %s20, 0
      %p35 = por %p33, %p34
      %p36 = scmp.ne.s32.totalorder %s28, %s30
      %p37 = scmp.eq.s32.totalorder %s25, 1
      %p38 = por %p36, %p37
      %p39 = scmp.ne.s32.totalorder %s30, %s31
      %p40 = scmp.eq.s32.totalorder %s25, 0
      %p41 = por %p39, %p40
      %p42 = scmp.ne.s32.totalorder %s30, %s31
      %p43 = scmp.eq.s32.totalorder %s26, 1
      %p44 = por %p42, %p43
      %p46 = scmp.ne.s32.totalorder %s31, %s45
      %p47 = scmp.eq.s32.totalorder %s26, 0
      %p48 = por %p46, %p47
      %s50 = sadd.s32 %s49, 1
      %p53 = scmp.eq.s32.totalorder %s20, 1
      %p54 = scmp.ne.s32.totalorder %s49, %s51
      %p55 = scmp.eq.s32.totalorder %s20, 0
      %p56 = por %p54, %p55
      %p57 = scmp.ne.s32.totalorder %s49, %s51
      %p58 = scmp.eq.s32.totalorder %s25, 1
      %p59 = por %p57, %p58
      %p60 = scmp.ne.s32.totalorder %s51, %s52
      %p61 = scmp.eq.s32.totalorder %s25, 0
      %p62 = por %p60, %p61
      %p63 = scmp.ne.s32.totalorder %s51, %s52
      %p64 = scmp.eq.s32.totalorder %s26, 1
      %p65 = por %p63, %p64
      %p67 = scmp.ne.s32.totalorder %s52, %s66
      %p68 = scmp.eq.s32.totalorder %s26, 0
      %p69 = por %p67, %p68
      %s71 = sadd.s32 %s70, 1
      %p74 = scmp.eq.s32.totalorder %s20, 1
      %p75 = scmp.ne.s32.totalorder %s70, %s72
      %p76 = scmp.eq.s32.totalorder %s20, 0
      %p77 = por %p75, %p76
      %p78 = scmp.ne.s32.totalorder %s70, %s72
      %p79 = scmp.eq.s32.totalorder %s25, 1
      %p80 = por %p78, %p79
      %p81 = scmp.ne.s32.totalorder %s72, %s73
      %p82 = scmp.eq.s32.totalorder %s25, 0
      %p83 = por %p81, %p82
      %p84 = scmp.ne.s32.totalorder %s72, %s73
      %p85 = scmp.eq.s32.totalorder %s26, 1
      %p86 = por %p84, %p85
      %p88 = scmp.ne.s32.totalorder %s73, %s87
      %p89 = scmp.eq.s32.totalorder %s26, 0
      %p90 = por %p88, %p89
      %s92 = sadd.s32 %s91, 1
      %p95 = scmp.eq.s32.totalorder %s20, 1
      %p96 = scmp.ne.s32.totalorder %s91, %s93
      %p97 = scmp.eq.s32.totalorder %s20, 0
      %p98 = por %p96, %p97
      %p99 = scmp.ne.s32.totalorder %s91, %s93
      %p100 = scmp.eq.s32.totalorder %s25, 1
      %p101 = por %p99, %p100
      %p102 = scmp.ne.s32.totalorder %s93, %s94
      %p103 = scmp.eq.s32.totalorder %s25, 0
      %p104 = por %p102, %p103
      %p105 = scmp.ne.s32.totalorder %s93, %s94
      %p106 = scmp.eq.s32.totalorder %s26, 1
      %p107 = por %p105, %p106
      %p109 = scmp.ne.s32.totalorder %s94, %s108
      %p110 = scmp.eq.s32.totalorder %s26, 0
      %p111 = por %p109, %p110
      %s112 = ssub.s32 %s20, %s27
      %p113 = scmp.eq.s32.totalorder %s112, 0
      %s115 = sadd.s32 %s114, 1
      %s116 = scalar_select %p113, %s114, %s115
      %p119 = pneg %p113
      %p120 = scmp.eq.s32.totalorder %s20, 1
      %p121 = por %p119, %p120
      %p122 = scmp.ne.s32.totalorder %s114, %s117
      %p123 = scmp.eq.s32.totalorder %s20, 0
      %p124 = por %p122, %p123
      %p125 = scmp.ne.s32.totalorder %s114, %s117
      %p126 = scmp.eq.s32.totalorder %s25, 1
      %p127 = por %p125, %p126
      %p128 = scmp.ne.s32.totalorder %s117, %s118
      %p129 = scmp.eq.s32.totalorder %s25, 0
      %p130 = por %p128, %p129
      %p131 = scmp.ne.s32.totalorder %s117, %s118
      %p132 = scmp.eq.s32.totalorder %s26, 1
      %p133 = por %p131, %p132
      %p135 = scmp.ne.s32.totalorder %s118, %s134
      %p136 = scmp.eq.s32.totalorder %s26, 0
      %p137 = por %p135, %p136
      %s138 = ssub.s32 %s20, %s27
      %p139 = scmp.eq.s32.totalorder %s138, 0
      %s141 = sadd.s32 %s140, 1
      %s142 = scalar_select %p139, %s140, %s141
      %p145 = pneg %p139
      %p146 = scmp.eq.s32.totalorder %s20, 1
      %p147 = por %p145, %p146
      %p148 = scmp.ne.s32.totalorder %s140, %s143
      %p149 = scmp.eq.s32.totalorder %s20, 0
      %p150 = por %p148, %p149
      %p151 = scmp.ne.s32.totalorder %s140, %s143
      %p152 = scmp.eq.s32.totalorder %s25, 1
      %p153 = por %p151, %p152
      %p154 = scmp.ne.s32.totalorder %s143, %s144
      %p155 = scmp.eq.s32.totalorder %s25, 0
      %p156 = por %p154, %p155
      %p157 = scmp.ne.s32.totalorder %s143, %s144
      %p158 = scmp.eq.s32.totalorder %s26, 1
      %p159 = por %p157, %p158
      %p161 = scmp.ne.s32.totalorder %s144, %s160
      %p162 = scmp.eq.s32.totalorder %s26, 0
      %p163 = por %p161, %p162
      %s164 = ssub.s32 %s20, %s27
      %p165 = scmp.eq.s32.totalorder %s164, 0
      %s167 = sadd.s32 %s166, 1
      %s168 = scalar_select %p165, %s166, %s167
      %p171 = pneg %p165
      %p172 = scmp.eq.s32.totalorder %s20, 1
      %p173 = por %p171, %p172
      %p174 = scmp.ne.s32.totalorder %s166, %s169
      %p175 = scmp.eq.s32.totalorder %s20, 0
      %p176 = por %p174, %p175
      %p177 = scmp.ne.s32.totalorder %s166, %s169
      %p178 = scmp.eq.s32.totalorder %s25, 1
      %p179 = por %p177, %p178
      %p180 = scmp.ne.s32.totalorder %s169, %s170
      %p181 = scmp.eq.s32.totalorder %s25, 0
      %p182 = por %p180, %p181
      %p183 = scmp.ne.s32.totalorder %s169, %s170
      %p184 = scmp.eq.s32.totalorder %s26, 1
      %p185 = por %p183, %p184
      %p187 = scmp.ne.s32.totalorder %s170, %s186
      %p188 = scmp.eq.s32.totalorder %s26, 0
      %p189 = por %p187, %p188
      %p190 = scmp.le.s32.totalorder 1, %s20
      %p191 = scmp.lt.s32.totalorder %s20, 3
      %p192 = pnand %p190, %p191
      %p193 = pneg %p192
      // Predicated region
      $region9: #{tpu_custom_call.1} parent=5 // pred_check
        _
      $region10: #{tpu_custom_call.1} parent=5 // pred_check_branch
        %195 = sbr.rel (%p192) target = $region12
      $region11: #{tpu_custom_call.1} parent=5 // pred_region
        %s196 = ssub.s32 %s20, 1
        // Predicated region
        $region13: #{tpu_custom_call.1} parent=11 // pred_check
          %p197 = pneg %p41
        $region14: #{tpu_custom_call.1} parent=11 // pred_check_branch
          %199 = sbr.rel (%p197) target = $region16
        $region15: #{tpu_custom_call.1} parent=11 // pred_region
          %s201 = ssub.s32 128, 128
          %202 = vsyncadd [#allocation3], %s201
          %s204 = sshll.u32 [#allocation2], 4
          %s205 = int_to_ptr.vmem [resolvable:$true] %s204
          %207 = dma.hbm_to_vmem [thread:$0]  %s0, 128, %s205, [#allocation3]
        $region16: #{tpu_custom_call.1} parent=11 // pred_fallthru
          _
        // Predicated region
        $region17: #{tpu_custom_call.1} parent=11 // pred_check
          %p208 = pneg %p62
        $region18: #{tpu_custom_call.1} parent=11 // pred_check_branch
          %210 = sbr.rel (%p208) target = $region20
        $region19: #{tpu_custom_call.1} parent=11 // pred_region
          %s212 = ssub.s32 128, 128
          %213 = vsyncadd [#allocation6], %s212
          %s215 = sshll.u32 [#allocation5], 4
          %s216 = int_to_ptr.vmem [resolvable:$true] %s215
          %218 = dma.hbm_to_vmem [thread:$0]  %s1, 128, %s216, [#allocation6]
        $region20: #{tpu_custom_call.1} parent=11 // pred_fallthru
          _
        // Predicated region
        $region21: #{tpu_custom_call.1} parent=11 // pred_check
          %p219 = pneg %p83
        $region22: #{tpu_custom_call.1} parent=11 // pred_check_branch
          %221 = sbr.rel (%p219) target = $region24
        $region23: #{tpu_custom_call.1} parent=11 // pred_region
          %s223 = ssub.s32 1024, 1024
          %224 = vsyncadd [#allocation6], %s223
          %s225 = sshll.u32 [#allocation7], 4
          %s226 = int_to_ptr.vmem [resolvable:$true] %s225
          %231 = dma.hbm_to_vmem [thread:$0]  %s2, 1024, %s226, [#allocation6], 64, 64, 4
        $region24: #{tpu_custom_call.1} parent=11 // pred_fallthru
          _
        // Predicated region
        $region25: #{tpu_custom_call.1} parent=11 // pred_check
          %p232 = pneg %p104
        $region26: #{tpu_custom_call.1} parent=11 // pred_check_branch
          %234 = sbr.rel (%p232) target = $region28
        $region27: #{tpu_custom_call.1} parent=11 // pred_region
          _
        $region28: #{tpu_custom_call.1} parent=11 // pred_fallthru
          _
      $region12: #{tpu_custom_call.1} parent=5 // pred_fallthru
        _
      %p235 = scmp.lt.s32.totalorder %s20, 2
      // Predicated region
      $region29: #{tpu_custom_call.1} parent=5 // pred_check
        %p236 = pneg %p235
      $region30: #{tpu_custom_call.1} parent=5 // pred_check_branch
        %238 = sbr.rel (%p236) target = $region32
      $region31: #{tpu_custom_call.1} parent=5 // pred_region
        // Predicated region
        $region33: #{tpu_custom_call.1} parent=31 // pred_check
          %p239 = pneg %p124
        $region34: #{tpu_custom_call.1} parent=31 // pred_check_branch
          %241 = sbr.rel (%p239) target = $region36
        $region35: #{tpu_custom_call.1} parent=31 // pred_region
          %s242 = sand.u32 %s114, 1
          %s243 = scalar_lea.sflag [#allocation9], %s242
          %s244 = sand.u32 %s114, 1
          %s245 = smul.addr %s244, 128
          %s246 = scalar_lea.vmem [#allocation8], %s245
          %s247 = smul.u32 2, %s20
          %s249 = ssub.s32 2048, 2048
          %250 = vsyncadd %s243, %s249
          %s251 = smul.addr %s247, 64
          %s252 = scalar_lea.hbm %s4, %s251
          %s253 = sshll.u32 %s246, 4
          %s254 = int_to_ptr.vmem [resolvable:$true] %s253
          %259 = dma.hbm_to_vmem [thread:$0]  %s252, 2048, %s254, %s243, 256, 128, 8
        $region36: #{tpu_custom_call.1} parent=31 // pred_fallthru
          _
        // Predicated region
        $region37: #{tpu_custom_call.1} parent=31 // pred_check
          %p260 = pneg %p150
        $region38: #{tpu_custom_call.1} parent=31 // pred_check_branch
          %262 = sbr.rel (%p260) target = $region40
        $region39: #{tpu_custom_call.1} parent=31 // pred_region
          %s263 = smul.u32 2, %s20
          %p264 = scmp.lt.s32.totalorder %s263, 3
          %s265 = scalar_select %p264, %s263, 3
          %s266 = scalar_lea.vmem %s5, %s265
          %s267 = smul.u32 2, %s20
        $region40: #{tpu_custom_call.1} parent=31 // pred_fallthru
          _
      $region32: #{tpu_custom_call.1} parent=5 // pred_fallthru
        _
      %p268 = scmp.le.s32.totalorder 1, %s20
      %p269 = scmp.lt.s32.totalorder %s20, 3
      %p270 = pnand %p268, %p269
      %p271 = pneg %p270
      // Predicated region
      $region41: #{tpu_custom_call.1} parent=5 // pred_check
        _
      $region42: #{tpu_custom_call.1} parent=5 // pred_check_branch
        %273 = sbr.rel (%p270) target = $region44
      $region43: #{tpu_custom_call.1} parent=5 // pred_region
        %s274 = ssub.s32 %s20, 1
        // Predicated region
        $region45: #{tpu_custom_call.1} parent=43 // pred_check
          %p275 = pneg %p41
        $region46: #{tpu_custom_call.1} parent=43 // pred_check_branch
          %277 = sbr.rel (%p275) target = $region48
        $region47: #{tpu_custom_call.1} parent=43 // pred_region
          %278 = dma.done [#allocation3], 128
        $region48: #{tpu_custom_call.1} parent=43 // pred_fallthru
          _
        // Predicated region
        $region49: #{tpu_custom_call.1} parent=43 // pred_check
          %p279 = pneg %p62
        $region50: #{tpu_custom_call.1} parent=43 // pred_check_branch
          %281 = sbr.rel (%p279) target = $region52
        $region51: #{tpu_custom_call.1} parent=43 // pred_region
          %282 = dma.done [#allocation6], 128
        $region52: #{tpu_custom_call.1} parent=43 // pred_fallthru
          _
        // Predicated region
        $region53: #{tpu_custom_call.1} parent=43 // pred_check
          %p283 = pneg %p83
        $region54: #{tpu_custom_call.1} parent=43 // pred_check_branch
          %285 = sbr.rel (%p283) target = $region56
        $region55: #{tpu_custom_call.1} parent=43 // pred_region
          %286 = dma.done [#allocation6], 1024
        $region56: #{tpu_custom_call.1} parent=43 // pred_fallthru
          _
        %s287 = sand.u32 %s117, 1
        %s288 = scalar_lea.sflag [#allocation9], %s287
        %s289 = sand.u32 %s117, 1
        %s290 = smul.addr %s289, 128
        %s291 = scalar_lea.vmem [#allocation8], %s290
        // Predicated region
        $region57: #{tpu_custom_call.1} parent=43 // pred_check
          %p292 = pneg %p130
        $region58: #{tpu_custom_call.1} parent=43 // pred_check_branch
          %294 = sbr.rel (%p292) target = $region60
        $region59: #{tpu_custom_call.1} parent=43 // pred_region
          %295 = dma.done %s288, 2048
        $region60: #{tpu_custom_call.1} parent=43 // pred_fallthru
          _
        %p296 = pneg %p41
        %p297 = pneg %p38
        %p298 = pneg %p62
        %p299 = pneg %p59
        %p300 = pneg %p83
        %p301 = pneg %p80
        %p302 = pneg %p104
        %p303 = pneg %p101
        %s304 = sand.u32 %s117, 1
        %s305 = scalar_lea.sflag [#allocation9], %s304
        %s306 = sand.u32 %s117, 1
        %s307 = smul.addr %s306, 128
        %s308 = scalar_lea.vmem [#allocation8], %s307
        %p309 = pneg %p130
        %p310 = pneg %p127
        %s311 = smul.u32 2, %s25
        %p312 = scmp.lt.s32.totalorder %s311, 3
        %s313 = scalar_select %p312, %s311, 3
        %s314 = scalar_lea.vmem %s5, %s313
        %p315 = pneg %p156
        %p316 = pneg %p153
        %p317 = pneg %p182
        %p318 = pneg %p179
        %s319 = sand.u32 %s169, 1
        %s320 = scalar_lea.sflag [#allocation4], %s319
        %s321 = sand.u32 %s169, 1
        %s322 = smul.addr %s321, 16
        %s323 = scalar_lea.vmem [#allocation10], %s322
        %s324 = smul.u32 2, %s25
        %s325 = smul.u32 2, %s25
        %p326 = scmp.lt.s32.totalorder %s325, 3
        %s327 = scalar_select %p326, %s325, 3
        %s328 = scalar_lea.vmem %s5, %s327
        %s329 = smul.u32 2, %s25
        %s330 = smul.u32 2, %s25
        %v332 = vld [vmem:[#allocation2] sm:$0xff]
        %v333 = vld [vmem:[#allocation5] sm:$0xff]
        %v334 = vmul.f32 %v332, %v333
        %v335 = vpack.c.bf16 %v334, %v334
        %v336 = vld [vmem:[#allocation7] sm:$0xf]
        %v337 = vld [vmem:[#allocation7 + $0x4] sm:$0xf]
        %v338 = vld [vmem:[#allocation7 + $0x8] sm:$0xf]
        %v339 = vld [vmem:[#allocation7 + $0xc] sm:$0xf]
        %v340 = vld [vmem:[#allocation7 + $0x10] sm:$0xf]
        %v341 = vld [vmem:[#allocation7 + $0x14] sm:$0xf]
        %v342 = vld [vmem:[#allocation7 + $0x18] sm:$0xf]
        %v343 = vld [vmem:[#allocation7 + $0x1c] sm:$0xf]
        %v344 = vld [vmem:[#allocation7 + $0x20] sm:$0xf]
        %v345 = vld [vmem:[#allocation7 + $0x24] sm:$0xf]
        %v346 = vld [vmem:[#allocation7 + $0x28] sm:$0xf]
        %v347 = vld [vmem:[#allocation7 + $0x2c] sm:$0xf]
        %v348 = vld [vmem:[#allocation7 + $0x30] sm:$0xf]
        %v349 = vld [vmem:[#allocation7 + $0x34] sm:$0xf]
        %v350 = vld [vmem:[#allocation7 + $0x38] sm:$0xf]
        %v351 = vld [vmem:[#allocation7 + $0x3c] sm:$0xf]
        %v352 = vld [vmem:[%s3] sm:$0x1]
        %v354 = vlaneseq
        %v355 = vshrl.u32 %v354, 7
        %v356 = vsub.s32 0, %v355
        %v357 = vrot.slane %v352, %v356
        %v375 = vunpack.c.l.b16 %v336
        %v376 = vunpack.c.l.b16 %v337
        %v377 = vunpack.c.l.b16 %v338
        %v378 = vunpack.c.l.b16 %v339
        %v379 = vunpack.c.l.b16 %v340
        %v380 = vunpack.c.l.b16 %v341
        %v381 = vunpack.c.l.b16 %v342
        %v382 = vunpack.c.l.b16 %v343
        %v383 = vunpack.c.l.b16 %v344
        %v384 = vunpack.c.l.b16 %v345
        %v385 = vunpack.c.l.b16 %v346
        %v386 = vunpack.c.l.b16 %v347
        %v387 = vunpack.c.l.b16 %v348
        %v388 = vunpack.c.l.b16 %v349
        %v389 = vunpack.c.l.b16 %v350
        %v390 = vunpack.c.l.b16 %v351
        %v391 = vpack.c.b16 %v376, %v375
        %v392 = vpack.c.b16 %v378, %v377
        %v393 = vpack.c.b16 %v380, %v379
        %v394 = vpack.c.b16 %v382, %v381
        %v395 = vpack.c.b16 %v384, %v383
        %v396 = vpack.c.b16 %v386, %v385
        %v397 = vpack.c.b16 %v388, %v387
        %v398 = vpack.c.b16 %v390, %v389
        %407 = vmatprep.subr.bf16.mxu0 0
        %408 = vmatpush1.bf16.msra.mxu0 %v398
        %409 = vmatprep.subr.bf16.mxu0 0
        %410 = vmatpush1.bf16.msra.mxu0 %v397
        %411 = vmatprep.subr.bf16.mxu0 0
        %412 = vmatpush1.bf16.msra.mxu0 %v396
        %413 = vmatprep.subr.bf16.mxu0 0
        %414 = vmatpush1.bf16.msra.mxu0 %v395
        %415 = vmatprep.subr.bf16.mxu0 0
        %416 = vmatpush1.bf16.msra.mxu0 %v394
        %417 = vmatprep.subr.bf16.mxu0 0
        %418 = vmatpush1.bf16.msra.mxu0 %v393
        %419 = vmatprep.subr.bf16.mxu0 0
        %420 = vmatpush1.bf16.msra.mxu0 %v392
        %421 = vmatprep.subr.bf16.mxu0 0
        %422 = vmatpush1.bf16.msra.mxu0 %v391
        %423 = vmatprep.subr.bf16.mxu0 0
        %424 = vmatpush2.bf16.msra.mxu0 0
        %425 = vmatprep.subr.bf16.mxu0 0
        %426 = vmatpush2.bf16.msra.mxu0 0
        %427 = vmatprep.subr.bf16.mxu0 0
        %428 = vmatpush2.bf16.msra.mxu0 0
        %429 = vmatprep.subr.bf16.mxu0 0
        %430 = vmatpush2.bf16.msra.mxu0 0
        %431 = vmatprep.subr.bf16.mxu0 0
        %432 = vmatpush2.bf16.msra.mxu0 0
        %433 = vmatprep.subr.bf16.mxu0 0
        %434 = vmatpush2.bf16.msra.mxu0 0
        %435 = vmatprep.subr.bf16.mxu0 0
        %436 = vmatpush2.bf16.msra.mxu0 0
        %437 = vmatprep.subr.bf16.mxu0 0
        %438 = vmatpush2.bf16.msra.mxu0 0
        %439 = vmatprep.mubr.bf16.mxu0 0
        %440 = vmatmul.mubr.bf16.gmra.mxu0 %v335
        %v441 = vpop.f32.mrf.mxu0
        %v442 = vadd.f32 %v357, %v441
        %v443 = vpop.f32.mrf.mxu0
        %v444 = vpop.f32.mrf.mxu0
        %v445 = vpop.f32.mrf.mxu0
        %446 = vdwg.mxu0
        %v447 = vmax.f32 %v442, 0.0
        %v448 = vpack.c.bf16 %v447, %v447
        %v449 = vld [vmem:[%s291] sm:$0xff]
        %v450 = vld [vmem:[%s291 + $0x8] sm:$0xff]
        %v451 = vld [vmem:[%s291 + $0x10] sm:$0xff]
        %v452 = vld [vmem:[%s291 + $0x18] sm:$0xff]
        %v453 = vld [vmem:[%s291 + $0x20] sm:$0xff]
        %v454 = vld [vmem:[%s291 + $0x28] sm:$0xff]
        %v455 = vld [vmem:[%s291 + $0x30] sm:$0xff]
        %v456 = vld [vmem:[%s291 + $0x38] sm:$0xff]
        %v457 = vld [vmem:[%s291 + $0x40] sm:$0xff]
        %v458 = vld [vmem:[%s291 + $0x48] sm:$0xff]
        %v459 = vld [vmem:[%s291 + $0x50] sm:$0xff]
        %v460 = vld [vmem:[%s291 + $0x58] sm:$0xff]
        %v461 = vld [vmem:[%s291 + $0x60] sm:$0xff]
        %v462 = vld [vmem:[%s291 + $0x68] sm:$0xff]
        %v463 = vld [vmem:[%s291 + $0x70] sm:$0xff]
        %v464 = vld [vmem:[%s291 + $0x78] sm:$0xff]
        %v465 = vld [vmem:[%s328] sm:$0x3]
        %v467 = vlaneseq
        %v468 = vshrl.u32 %v467, 7
        %v469 = vsub.s32 0, %v468
        %v470 = vrot.slane %v465, %v469
        %v471 = vlaneseq
        %v472 = vshrl.u32 %v471, 7
        %v473 = vsub.s32 1, %v472
        %v474 = vrot.slane %v465, %v473
        %v493 = vunpack.c.l.b16 %v449
        %v494 = vunpack.c.h.b16 %v449
        %v495 = vunpack.c.l.b16 %v450
        %v496 = vunpack.c.h.b16 %v450
        %v497 = vunpack.c.l.b16 %v451
        %v498 = vunpack.c.h.b16 %v451
        %v499 = vunpack.c.l.b16 %v452
        %v500 = vunpack.c.h.b16 %v452
        %v501 = vunpack.c.l.b16 %v453
        %v502 = vunpack.c.h.b16 %v453
        %v503 = vunpack.c.l.b16 %v454
        %v504 = vunpack.c.h.b16 %v454
        %v505 = vunpack.c.l.b16 %v455
        %v506 = vunpack.c.h.b16 %v455
        %v507 = vunpack.c.l.b16 %v456
        %v508 = vunpack.c.h.b16 %v456
        %v509 = vunpack.c.l.b16 %v457
        %v510 = vunpack.c.h.b16 %v457
        %v511 = vunpack.c.l.b16 %v458
        %v512 = vunpack.c.h.b16 %v458
        %v513 = vunpack.c.l.b16 %v459
        %v514 = vunpack.c.h.b16 %v459
        %v515 = vunpack.c.l.b16 %v460
        %v516 = vunpack.c.h.b16 %v460
        %v517 = vunpack.c.l.b16 %v461
        %v518 = vunpack.c.h.b16 %v461
        %v519 = vunpack.c.l.b16 %v462
        %v520 = vunpack.c.h.b16 %v462
        %v521 = vunpack.c.l.b16 %v463
        %v522 = vunpack.c.h.b16 %v463
        %v523 = vunpack.c.l.b16 %v464
        %v524 = vunpack.c.h.b16 %v464
        %v525 = vpack.c.b16 %v495, %v493
        %v526 = vpack.c.b16 %v496, %v494
        %v527 = vpack.c.b16 %v499, %v497
        %v528 = vpack.c.b16 %v500, %v498
        %v529 = vpack.c.b16 %v503, %v501
        %v530 = vpack.c.b16 %v504, %v502
        %v531 = vpack.c.b16 %v507, %v505
        %v532 = vpack.c.b16 %v508, %v506
        %v533 = vpack.c.b16 %v511, %v509
        %v534 = vpack.c.b16 %v512, %v510
        %v535 = vpack.c.b16 %v515, %v513
        %v536 = vpack.c.b16 %v516, %v514
        %v537 = vpack.c.b16 %v519, %v517
        %v538 = vpack.c.b16 %v520, %v518
        %v539 = vpack.c.b16 %v523, %v521
        %v540 = vpack.c.b16 %v524, %v522
        %557 = vmatprep.subr.bf16.mxu0 %v540
        %558 = vmatpush1.bf16.msra.mxu0 %v539
        %559 = vmatprep.subr.bf16.mxu0 %v538
        %560 = vmatpush1.bf16.msra.mxu0 %v537
        %561 = vmatprep.subr.bf16.mxu0 %v536
        %562 = vmatpush1.bf16.msra.mxu0 %v535
        %563 = vmatprep.subr.bf16.mxu0 %v534
        %564 = vmatpush1.bf16.msra.mxu0 %v533
        %565 = vmatprep.subr.bf16.mxu0 %v532
        %566 = vmatpush1.bf16.msra.mxu0 %v531
        %567 = vmatprep.subr.bf16.mxu0 %v530
        %568 = vmatpush1.bf16.msra.mxu0 %v529
        %569 = vmatprep.subr.bf16.mxu0 %v528
        %570 = vmatpush1.bf16.msra.mxu0 %v527
        %571 = vmatprep.subr.bf16.mxu0 %v526
        %572 = vmatpush1.bf16.msra.mxu0 %v525
        %573 = vmatprep.subr.bf16.mxu0 0
        %574 = vmatpush2.bf16.msra.mxu0 0
        %575 = vmatprep.subr.bf16.mxu0 0
        %576 = vmatpush2.bf16.msra.mxu0 0
        %577 = vmatprep.subr.bf16.mxu0 0
        %578 = vmatpush2.bf16.msra.mxu0 0
        %579 = vmatprep.subr.bf16.mxu0 0
        %580 = vmatpush2.bf16.msra.mxu0 0
        %581 = vmatprep.subr.bf16.mxu0 0
        %582 = vmatpush2.bf16.msra.mxu0 0
        %583 = vmatprep.subr.bf16.mxu0 0
        %584 = vmatpush2.bf16.msra.mxu0 0
        %585 = vmatprep.subr.bf16.mxu0 0
        %586 = vmatpush2.bf16.msra.mxu0 0
        %587 = vmatprep.subr.bf16.mxu0 0
        %588 = vmatpush2.bf16.msra.mxu0 0
        %589 = vmatprep.mubr.bf16.mxu0 0
        %590 = vmatmul.mubr.bf16.gmra.mxu0 %v448
        %v591 = vpop.f32.mrf.mxu0
        %v592 = vadd.f32 %v470, %v591
        %v593 = vpop.f32.mrf.mxu0
        %v594 = vadd.f32 %v474, %v593
        %v595 = vpop.f32.mrf.mxu0
        %v596 = vpop.f32.mrf.mxu0
        %597 = vdwg.mxu0
        %598 = vst [vmem:[%s323] sm:$0xff] %v592
        %599 = vst [vmem:[%s323 + $0x8] sm:$0xff] %v594
        %s600 = sand.u32 %s169, 1
        %s601 = scalar_lea.sflag [#allocation4], %s600
        %s602 = sand.u32 %s169, 1
        %s603 = smul.addr %s602, 16
        %s604 = scalar_lea.vmem [#allocation10], %s603
        // Predicated region
        $region61: #{tpu_custom_call.1} parent=43 // pred_check
          %p605 = pneg %p179
        $region62: #{tpu_custom_call.1} parent=43 // pred_check_branch
          %607 = sbr.rel (%p605) target = $region64
        $region63: #{tpu_custom_call.1} parent=43 // pred_region
          %s608 = smul.u32 2, %s25
          %s610 = ssub.s32 256, 256
          %611 = vsyncadd %s601, %s610
          %s612 = smul.addr %s608, 128
          %s613 = scalar_lea.hbm %s6, %s612
          %s615 = sshll.u32 %s604, 4
          %s616 = int_to_ptr.vmem [resolvable:$true] %s615
          %618 = dma.vmem_to_hbm [thread:$0]  %s616, 256, %s613, %s601
        $region64: #{tpu_custom_call.1} parent=43 // pred_fallthru
          _
      $region44: #{tpu_custom_call.1} parent=5 // pred_fallthru
        _
      %p619 = scmp.le.s32.totalorder 2, %s20
      // Predicated region
      $region65: #{tpu_custom_call.1} parent=5 // pred_check
        %p620 = pneg %p619
      $region66: #{tpu_custom_call.1} parent=5 // pred_check_branch
        %622 = sbr.rel (%p620) target = $region68
      $region67: #{tpu_custom_call.1} parent=5 // pred_region
        %s623 = ssub.s32 %s20, 2
        // Predicated region
        $region69: #{tpu_custom_call.1} parent=67 // pred_check
          %p624 = pneg %p185
        $region70: #{tpu_custom_call.1} parent=67 // pred_check_branch
          %626 = sbr.rel (%p624) target = $region72
        $region71: #{tpu_custom_call.1} parent=67 // pred_region
          %s627 = sand.u32 %s170, 1
          %s628 = scalar_lea.sflag [#allocation4], %s627
          %s629 = sand.u32 %s170, 1
          %s630 = smul.addr %s629, 16
          %s631 = scalar_lea.vmem [#allocation10], %s630
          %632 = dma.done %s628, 256
        $region72: #{tpu_custom_call.1} parent=67 // pred_fallthru
          _
      $region68: #{tpu_custom_call.1} parent=5 // pred_fallthru
        _
    $region6: #{tpu_custom_call.1} parent=1 // loop_footer
      %s24 = sadd.s32 1, %s20
    $region7: #{tpu_custom_call.1} parent=1 // loop_footer_branch
      %19 = sbr.rel target = $region3
    $region8: #{tpu_custom_call.1} parent=1 // loop_exit
      _
    %633 = vsyncpa [#allocation3], 1
    %s634 = scalar_lea.sflag [#allocation3], 1
    %635 = vsyncpa %s634, 1
    %636 = vsyncpa [#allocation6], 1
    %637 = vsyncpa [#allocation9], 1
    %s638 = scalar_lea.sflag [#allocation9], 1
    %639 = vsyncpa %s638, 1
    %640 = vsyncpa [#allocation4], 1
    %s641 = scalar_lea.sflag [#allocation4], 1
    %642 = vsyncpa %s641, 1

</llo_original>
